<compile_context>
chip_gen: v6e
topology: v6e:2x2x1
jax: 0.10.0
libtpu: 0.0.40
codegen_flags: <defaults>
</compile_context>

<pallas_src>
import functools

import jax
import jax.numpy as jnp
from jax.experimental import pallas as pl
from jax.experimental.pallas import tpu as pltpu


# --------------------------------------------------------------------------
# Kernel
# --------------------------------------------------------------------------
def _vae_fwd_kernel(
    x_ref, eps_ref,
    w1_ref, b1_ref,
    w2_ref, b2_ref,          # fused [w21; w22] ([2L, H]), [b21; b22] ([2L, 1])
    w3_ref, b3_ref,
    w4_ref, b4_ref,
    out_ref,                 # packed [D_in + 2L, tb] = [recon ; mu ; log_sigma]
    *, latent, d_in,
):
    def mm(w_ref, a, b_ref):
        # y_fm = W @ a + b   (W in PyTorch [out, in] layout, batch on lanes)
        return jnp.dot(w_ref[...], a, preferred_element_type=jnp.float32) + b_ref[...]

    x = x_ref[...]                                        # [D_in, tb]

    # encoder: h1 = relu(fc1(x)); fused fc21/fc22 -> [mu ; log_sigma]
    h1 = jnp.maximum(mm(w1_ref, x, b1_ref), 0.0)          # [H, tb]
    mu_ls = mm(w2_ref, h1, b2_ref)                        # [2L, tb]
    mu = mu_ls[:latent, :]                                # sublane slice (aligned)
    log_sigma = mu_ls[latent:, :]

    # reparametrize: z = mu + eps * exp(0.5 * log_sigma)  (VPU + EUP, f32)
    # TODO(synk): eps could be generated in-kernel via pltpu.prng_seed /
    # pltpu.prng_random_bits to save ~L columns of HBM traffic per row.
    z = mu + eps_ref[...] * jnp.exp(0.5 * log_sigma)      # [L, tb]

    # decoder: tanh(fc4(relu(fc3(z))))
    h3 = jnp.maximum(mm(w3_ref, z, b3_ref), 0.0)          # [H, tb]
    recon = jnp.tanh(mm(w4_ref, h3, b4_ref))              # [D_in, tb]

    # Two aligned sublane-offset, full-lane-width stores into one packed slab.
    out_ref[:d_in, :] = recon
    out_ref[d_in:, :] = mu_ls


# --------------------------------------------------------------------------
# Hardware-aware helpers
# --------------------------------------------------------------------------
def _num_tensorcores():
    """2 on v7x (2 TCs/chip), 1 on v5e/v6e. Defensive fallback to 1."""
    try:
        kind = str(getattr(jax.devices()[0], "device_kind", "")).lower()
        if "v7" in kind:
            return 2
    except Exception:
        pass
    return 1


def _pick_batch_tile(B, batch_tile, num_tensorcores):
    """Batch now lives on the lane axis: interior tiles must be 128-multiples."""
    tb = min(batch_tile, B)
    if tb < B:
        tb = (tb // 128) * 128
        if tb == 0 or tb >= B:
            tb = B                       # tiny batch: single whole-batch tile
    if tb == B and num_tensorcores >= 2 and B % 256 == 0:
        # Only split a whole-batch tile where a second TensorCore exists (v7x).
        tb = B // 2
    return tb


def _vmem_limit_bytes(tb, d_in, latent, weight_elems):
    d_out = d_in + 2 * latent
    per_step = 4 * tb * (d_in + latent + d_out)      # streamed x + eps + out tile (f32)
    need = 2 * per_step + 4 * weight_elems           # double-buffered streams + resident weights
    cap = 128 << 20                                  # v5e/v6e physical VMEM
    try:
        cap = int(getattr(pltpu.get_tpu_info(), "vmem_capacity_bytes", cap))
    except Exception:
        pass
    ceiling = max(32 << 20, (cap * 7) // 8)          # ~56 MiB/TC on v7x, ~112 MiB on v5e/v6e
    return int(min(ceiling, max(32 << 20, 4 * need)))


# --------------------------------------------------------------------------
# Wrappers
# --------------------------------------------------------------------------
def vec_vae_forward_packed(x_fm, eps_fm, params, *, batch_tile=4096):
    """Recommended fast path.

    Args:
      x_fm:   [D_in, B] feature-major input.
      eps_fm: [L, B] feature-major reparameterization noise.
      params: weights in PyTorch nn.Linear layout ([out, in]), biases [out, 1].

    Returns:
      Packed feature-major slab [D_in + 2L, B] = [recon ; mu ; log_sigma],
      with no wrapper-side splitting (consumers can slice lazily / fuse).
    """
    D_in, B = x_fm.shape
    H = params["w1"].shape[0]
    L = params["w21"].shape[0]
    assert eps_fm.shape == (L, B)

    # Fuse fc21/fc22 into one [2L, H] matmul (wrapper-side packing is free).
    w2 = jnp.concatenate([params["w21"], params["w22"]], axis=0)    # [2L, H]
    b2 = jnp.concatenate([params["b21"], params["b22"]], axis=0)    # [2L, 1]

    num_tc = _num_tensorcores()
    tb = _pick_batch_tile(B, batch_tile, num_tc)
    grid = (pl.cdiv(B, tb),)
    D_out = D_in + 2 * L

    def batch_spec(rows):
        # Feature-major: grid index tiles the lane (batch) axis.
        return pl.BlockSpec((rows, tb), lambda i: (0, i))

    def full_spec(shape):
        # Constant index map: Pallas fetches once, keeps resident across steps.
        return pl.BlockSpec(shape, lambda i: (0, 0))

    in_specs = [
        batch_spec(D_in),                      # x_fm
        batch_spec(L),                         # eps_fm
        full_spec(params["w1"].shape), full_spec(params["b1"].shape),
        full_spec(w2.shape),           full_spec(b2.shape),
        full_spec(params["w3"].shape), full_spec(params["b3"].shape),
        full_spec(params["w4"].shape), full_spec(params["b4"].shape),
    ]
    out_specs = batch_spec(D_out)
    out_shape = jax.ShapeDtypeStruct((D_out, B), jnp.float32)

    flops = 2 * B * (D_in * H + H * (2 * L) + L * H + H * D_in)
    transcendentals = B * (L + D_in)           # exp (reparam) + tanh (recon)
    weight_elems = (H * D_in + H + 2 * L * H + 2 * L
                    + H * L + H + D_in * H + D_in)
    bytes_accessed = 4 * (B * D_in + B * L + weight_elems + B * D_out)

    kernel = functools.partial(_vae_fwd_kernel, latent=L, d_in=D_in)

    fn = pl.pallas_call(
        kernel,
        out_shape=out_shape,
        grid=grid,
        in_specs=in_specs,
        out_specs=out_specs,
        compiler_params=pltpu.CompilerParams(
            dimension_semantics=("parallel",),
            vmem_limit_bytes=_vmem_limit_bytes(tb, D_in, L, weight_elems),
        ),
        cost_estimate=pl.CostEstimate(
            flops=flops,
            transcendentals=transcendentals,
            bytes_accessed=bytes_accessed,
        ),
    )
    return fn(
        x_fm, eps_fm,
        params["w1"], params["b1"],
        w2, b2,
        params["w3"], params["b3"],
        params["w4"], params["b4"],
    )


def vec_vae_forward(x, eps, params, *, batch_tile=4096):
    """PyTorch-shaped convenience API: x [B, D_in], eps [B, L] ->
    (recon [B, D_in], mu [B, L], log_sigma [B, L]).

    NOTE: the transposes/slices below are separate XLA copies; prefer
    `vec_vae_forward_packed` (feature-major in/out) on the hot path.
    """
    D_in = x.shape[1]
    L = eps.shape[1]
    packed = vec_vae_forward_packed(x.T, eps.T, params, batch_tile=batch_tile)
    recon = packed[:D_in, :].T
    mu = packed[D_in:D_in + L, :].T
    log_sigma = packed[D_in + L:, :].T
    return recon, mu, log_sigma


# --------------------------------------------------------------------------
# Parameters + pure-JAX reference
# --------------------------------------------------------------------------
def init_params(key, input_space, latent_space):
    """Deterministic synthetic parameters (shapes follow VecVAE.__init__).

    Weights are in native PyTorch nn.Linear layout [out_features, in_features];
    biases are [out_features, 1] (column vectors for feature-major broadcast).
    """
    hidden = latent_space * 2
    shapes = {
        "w1": (hidden, input_space),      "b1": (hidden, 1),
        "w21": (latent_space, hidden),    "b21": (latent_space, 1),
        "w22": (latent_space, hidden),    "b22": (latent_space, 1),
        "w3": (hidden, latent_space),     "b3": (hidden, 1),
        "w4": (input_space, hidden),      "b4": (input_space, 1),
    }
    params = {}
    keys = jax.random.split(key, len(shapes))
    for k, (name, shape) in zip(keys, sorted(shapes.items())):
        fan_in = shape[1] if name.startswith("w") else shapes["w" + name[1:]][1]
        bound = 1.0 / (float(fan_in) ** 0.5)
        params[name] = jax.random.uniform(
            k, shape, jnp.float32, minval=-bound, maxval=bound
        )
    return params


def vec_vae_forward_ref(x, eps, params):
    """Plain-JAX reference (batch-major, matches the PyTorch module)."""
    h1 = jax.nn.relu(x @ params["w1"].T + params["b1"].T)
    mu = h1 @ params["w21"].T + params["b21"].T
    log_sigma = h1 @ params["w22"].T + params["b22"].T
    z = mu + eps * jnp.exp(0.5 * log_sigma)
    h3 = jax.nn.relu(z @ params["w3"].T + params["b3"].T)
    recon = jnp.tanh(h3 @ params["w4"].T + params["b4"].T)
    return recon, mu, log_sigma


# --------------------------------------------------------------------------
# Self-test
# --------------------------------------------------------------------------
if __name__ == "__main__":
    input_space = 32
    latent_space = 8
    batch = 256

    root = jax.random.PRNGKey(0)
    k_params, k_x, k_eps = jax.random.split(root, 3)

    params = init_params(k_params, input_space, latent_space)
    x = jax.random.normal(k_x, (batch, input_space), jnp.float32)
    # eps ~ randn_like(std): drawn once in the wrapper for determinism.
    eps = jax.random.normal(k_eps, (batch, latent_space), jnp.float32)

    recon_ref, mu_ref, ls_ref = vec_vae_forward_ref(x, eps, params)

    # Recommended path: feature-major in, packed feature-major slab out.
    packed = vec_vae_forward_packed(x.T, eps.T, params)
    jax.block_until_ready(packed)
    D_out = input_space + 2 * latent_space
    assert packed.shape == (D_out, batch)
    assert jnp.allclose(packed[:input_space].T, recon_ref, atol=1e-5, rtol=1e-5)
    assert jnp.allclose(
        packed[input_space:input_space + latent_space].T, mu_ref,
        atol=1e-5, rtol=1e-5)
    assert jnp.allclose(
        packed[input_space + latent_space:].T, ls_ref, atol=1e-5, rtol=1e-5)

    # PyTorch-shaped tuple API (drop-in forward() semantics).
    recon, mu, log_sigma = vec_vae_forward(x, eps, params)
    jax.block_until_ready((recon, mu, log_sigma))
    assert recon.shape == (batch, input_space)
    assert mu.shape == (batch, latent_space)
    assert log_sigma.shape == (batch, latent_space)
    assert jnp.allclose(recon, recon_ref, atol=1e-5, rtol=1e-5)
    assert jnp.allclose(mu, mu_ref, atol=1e-5, rtol=1e-5)
    assert jnp.allclose(log_sigma, ls_ref, atol=1e-5, rtol=1e-5)

    # Multi-tile grid path (exercises lane-axis tiling / pipelining).
    packed_tiled = vec_vae_forward_packed(x.T, eps.T, params, batch_tile=128)
    jax.block_until_ready(packed_tiled)
    assert jnp.allclose(packed_tiled, packed, atol=1e-6, rtol=1e-6)

    print("KERNEL_OK")
</pallas_src>

<mosaic_0001>
module attributes {stable_mosaic.version = 11 : i64} {
  func.func @_vae_fwd_kernel(%arg0: i32, %arg1: memref<32x256xf32, #tpu.memory_space<vmem>>, %arg2: memref<8x256xf32, #tpu.memory_space<vmem>>, %arg3: memref<16x32xf32, #tpu.memory_space<vmem>>, %arg4: memref<16x1xf32, #tpu.memory_space<vmem>>, %arg5: memref<16x16xf32, #tpu.memory_space<vmem>>, %arg6: memref<16x1xf32, #tpu.memory_space<vmem>>, %arg7: memref<16x8xf32, #tpu.memory_space<vmem>>, %arg8: memref<16x1xf32, #tpu.memory_space<vmem>>, %arg9: memref<32x16xf32, #tpu.memory_space<vmem>>, %arg10: memref<32x1xf32, #tpu.memory_space<vmem>>, %arg11: memref<48x256xf32, #tpu.memory_space<vmem>>) attributes {dimension_semantics = [#tpu.dimension_semantics<parallel>], iteration_bounds = array<i64: 1>, scalar_prefetch = 0 : i64, scratch_operands = 0 : i64, tpu.core_type = #tpu.core_type<tc>, window_params = [{transform_indices = @transform_0, window_bounds = array<i64: 32, 256>}, {transform_indices = @transform_1, window_bounds = array<i64: 8, 256>}, {pipeline_mode = #tpu.pipeline_mode<synchronous>, transform_indices = @transform_2, window_bounds = array<i64: 16, 32>}, {pipeline_mode = #tpu.pipeline_mode<synchronous>, transform_indices = @transform_3, window_bounds = array<i64: 16, 1>}, {pipeline_mode = #tpu.pipeline_mode<synchronous>, transform_indices = @transform_4, window_bounds = array<i64: 16, 16>}, {pipeline_mode = #tpu.pipeline_mode<synchronous>, transform_indices = @transform_5, window_bounds = array<i64: 16, 1>}, {pipeline_mode = #tpu.pipeline_mode<synchronous>, transform_indices = @transform_6, window_bounds = array<i64: 16, 8>}, {pipeline_mode = #tpu.pipeline_mode<synchronous>, transform_indices = @transform_7, window_bounds = array<i64: 16, 1>}, {pipeline_mode = #tpu.pipeline_mode<synchronous>, transform_indices = @transform_8, window_bounds = array<i64: 32, 16>}, {pipeline_mode = #tpu.pipeline_mode<synchronous>, transform_indices = @transform_9, window_bounds = array<i64: 32, 1>}, {transform_indices = @transform_10, window_bounds = array<i64: 48, 256>}]} {
    %c0 = arith.constant 0 : index
    %c0_0 = arith.constant 0 : index
    %0 = vector.load %arg1[%c0, %c0_0] : memref<32x256xf32, #tpu.memory_space<vmem>>, vector<32x256xf32>
    %c0_1 = arith.constant 0 : index
    %c0_2 = arith.constant 0 : index
    %1 = vector.load %arg3[%c0_1, %c0_2] : memref<16x32xf32, #tpu.memory_space<vmem>>, vector<16x32xf32>
    %cst = arith.constant dense<0.000000e+00> : vector<16x256xf32>
    %2 = tpu.matmul %1, %0, %cst {dimension_numbers = #tpu.dot_dimension_numbers<[1], [0], [0], [1], [0, 0, 1, 1], [], []>} : vector<16x32xf32>, vector<32x256xf32>, vector<16x256xf32> -> vector<16x256xf32>
    %c0_3 = arith.constant 0 : index
    %c0_4 = arith.constant 0 : index
    %3 = vector.load %arg4[%c0_3, %c0_4] : memref<16x1xf32, #tpu.memory_space<vmem>>, vector<16x1xf32>
    %4 = vector.broadcast %3 : vector<16x1xf32> to vector<16x256xf32>
    %5 = arith.addf %2, %4 : vector<16x256xf32>
    %cst_5 = arith.constant 0.000000e+00 : f32
    %6 = vector.broadcast %cst_5 : f32 to vector<16x256xf32>
    %7 = arith.maximumf %5, %6 : vector<16x256xf32>
    %c0_6 = arith.constant 0 : index
    %c0_7 = arith.constant 0 : index
    %8 = vector.load %arg5[%c0_6, %c0_7] : memref<16x16xf32, #tpu.memory_space<vmem>>, vector<16x16xf32>
    %cst_8 = arith.constant dense<0.000000e+00> : vector<16x256xf32>
    %9 = tpu.matmul %8, %7, %cst_8 {dimension_numbers = #tpu.dot_dimension_numbers<[1], [0], [0], [1], [0, 0, 1, 1], [], []>} : vector<16x16xf32>, vector<16x256xf32>, vector<16x256xf32> -> vector<16x256xf32>
    %c0_9 = arith.constant 0 : index
    %c0_10 = arith.constant 0 : index
    %10 = vector.load %arg6[%c0_9, %c0_10] : memref<16x1xf32, #tpu.memory_space<vmem>>, vector<16x1xf32>
    %11 = vector.broadcast %10 : vector<16x1xf32> to vector<16x256xf32>
    %12 = arith.addf %9, %11 : vector<16x256xf32>
    %13 = vector.extract_strided_slice %12 {offsets = [0, 0], sizes = [8, 256], strides = [1, 1]} : vector<16x256xf32> to vector<8x256xf32>
    %14 = vector.extract_strided_slice %12 {offsets = [8, 0], sizes = [8, 256], strides = [1, 1]} : vector<16x256xf32> to vector<8x256xf32>
    %c0_11 = arith.constant 0 : index
    %c0_12 = arith.constant 0 : index
    %15 = vector.load %arg2[%c0_11, %c0_12] : memref<8x256xf32, #tpu.memory_space<vmem>>, vector<8x256xf32>
    %cst_13 = arith.constant 5.000000e-01 : f32
    %16 = vector.broadcast %cst_13 : f32 to vector<8x256xf32>
    %17 = arith.mulf %16, %14 : vector<8x256xf32>
    %18 = math.exp %17 : vector<8x256xf32>
    %19 = arith.mulf %15, %18 : vector<8x256xf32>
    %20 = arith.addf %13, %19 : vector<8x256xf32>
    %c0_14 = arith.constant 0 : index
    %c0_15 = arith.constant 0 : index
    %21 = vector.load %arg7[%c0_14, %c0_15] : memref<16x8xf32, #tpu.memory_space<vmem>>, vector<16x8xf32>
    %cst_16 = arith.constant dense<0.000000e+00> : vector<16x256xf32>
    %22 = tpu.matmul %21, %20, %cst_16 {dimension_numbers = #tpu.dot_dimension_numbers<[1], [0], [0], [1], [0, 0, 1, 1], [], []>} : vector<16x8xf32>, vector<8x256xf32>, vector<16x256xf32> -> vector<16x256xf32>
    %c0_17 = arith.constant 0 : index
    %c0_18 = arith.constant 0 : index
    %23 = vector.load %arg8[%c0_17, %c0_18] : memref<16x1xf32, #tpu.memory_space<vmem>>, vector<16x1xf32>
    %24 = vector.broadcast %23 : vector<16x1xf32> to vector<16x256xf32>
    %25 = arith.addf %22, %24 : vector<16x256xf32>
    %cst_19 = arith.constant 0.000000e+00 : f32
    %26 = vector.broadcast %cst_19 : f32 to vector<16x256xf32>
    %27 = arith.maximumf %25, %26 : vector<16x256xf32>
    %c0_20 = arith.constant 0 : index
    %c0_21 = arith.constant 0 : index
    %28 = vector.load %arg9[%c0_20, %c0_21] : memref<32x16xf32, #tpu.memory_space<vmem>>, vector<32x16xf32>
    %cst_22 = arith.constant dense<0.000000e+00> : vector<32x256xf32>
    %29 = tpu.matmul %28, %27, %cst_22 {dimension_numbers = #tpu.dot_dimension_numbers<[1], [0], [0], [1], [0, 0, 1, 1], [], []>} : vector<32x16xf32>, vector<16x256xf32>, vector<32x256xf32> -> vector<32x256xf32>
    %c0_23 = arith.constant 0 : index
    %c0_24 = arith.constant 0 : index
    %30 = vector.load %arg10[%c0_23, %c0_24] : memref<32x1xf32, #tpu.memory_space<vmem>>, vector<32x1xf32>
    %31 = vector.broadcast %30 : vector<32x1xf32> to vector<32x256xf32>
    %32 = arith.addf %29, %31 : vector<32x256xf32>
    %33 = math.tanh %32 : vector<32x256xf32>
    %c0_25 = arith.constant 0 : index
    %c0_26 = arith.constant 0 : index
    %34 = vector.load %arg11[%c0_25, %c0_26] : memref<48x256xf32, #tpu.memory_space<vmem>>, vector<32x256xf32>
    tpu.vector_store %arg11[%c0_25, %c0_26], %33 {strides = array<i32>} : memref<48x256xf32, #tpu.memory_space<vmem>>, vector<32x256xf32>,
    %c32 = arith.constant 32 : index
    %c0_27 = arith.constant 0 : index
    %35 = vector.load %arg11[%c32, %c0_27] : memref<48x256xf32, #tpu.memory_space<vmem>>, vector<16x256xf32>
    tpu.vector_store %arg11[%c32, %c0_27], %12 {strides = array<i32>} : memref<48x256xf32, #tpu.memory_space<vmem>>, vector<16x256xf32>,
    return
  }
  func.func @transform_0(%arg0: i32) -> (i32, i32) {
    %c0_i32 = arith.constant 0 : i32
    %c0_i32_0 = arith.constant 0 : i32
    return %c0_i32, %arg0 : i32, i32
  }
  func.func @transform_1(%arg0: i32) -> (i32, i32) {
    %c0_i32 = arith.constant 0 : i32
    %c0_i32_0 = arith.constant 0 : i32
    return %c0_i32, %arg0 : i32, i32
  }
  func.func @transform_2(%arg0: i32) -> (i32, i32) {
    %c0_i32 = arith.constant 0 : i32
    %c0_i32_0 = arith.constant 0 : i32
    %c0_i32_1 = arith.constant 0 : i32
    return %c0_i32, %c0_i32_0 : i32, i32
  }
  func.func @transform_3(%arg0: i32) -> (i32, i32) {
    %c0_i32 = arith.constant 0 : i32
    %c0_i32_0 = arith.constant 0 : i32
    %c0_i32_1 = arith.constant 0 : i32
    return %c0_i32, %c0_i32_0 : i32, i32
  }
  func.func @transform_4(%arg0: i32) -> (i32, i32) {
    %c0_i32 = arith.constant 0 : i32
    %c0_i32_0 = arith.constant 0 : i32
    %c0_i32_1 = arith.constant 0 : i32
    return %c0_i32, %c0_i32_0 : i32, i32
  }
  func.func @transform_5(%arg0: i32) -> (i32, i32) {
    %c0_i32 = arith.constant 0 : i32
    %c0_i32_0 = arith.constant 0 : i32
    %c0_i32_1 = arith.constant 0 : i32
    return %c0_i32, %c0_i32_0 : i32, i32
  }
  func.func @transform_6(%arg0: i32) -> (i32, i32) {
    %c0_i32 = arith.constant 0 : i32
    %c0_i32_0 = arith.constant 0 : i32
    %c0_i32_1 = arith.constant 0 : i32
    return %c0_i32, %c0_i32_0 : i32, i32
  }
  func.func @transform_7(%arg0: i32) -> (i32, i32) {
    %c0_i32 = arith.constant 0 : i32
    %c0_i32_0 = arith.constant 0 : i32
    %c0_i32_1 = arith.constant 0 : i32
    return %c0_i32, %c0_i32_0 : i32, i32
  }
  func.func @transform_8(%arg0: i32) -> (i32, i32) {
    %c0_i32 = arith.constant 0 : i32
    %c0_i32_0 = arith.constant 0 : i32
    %c0_i32_1 = arith.constant 0 : i32
    return %c0_i32, %c0_i32_0 : i32, i32
  }
  func.func @transform_9(%arg0: i32) -> (i32, i32) {
    %c0_i32 = arith.constant 0 : i32
    %c0_i32_0 = arith.constant 0 : i32
    %c0_i32_1 = arith.constant 0 : i32
    return %c0_i32, %c0_i32_0 : i32, i32
  }
  func.func @transform_10(%arg0: i32) -> (i32, i32) {
    %c0_i32 = arith.constant 0 : i32
    %c0_i32_0 = arith.constant 0 : i32
    return %c0_i32, %arg0 : i32, i32
  }
}

</mosaic_0001>

<llo_original>
// kernel: tpu_custom_call.1
$region0: #{tpu_custom_call.1}
  #allocation0 [shape = 'u32[]', space=smem, size = 0x4, offset = 0x4, fixed_abs, tag = 'smem constant byte address 0x4 - core index']
  #allocation1 [shape = 'u32[144,128]{1,0:T(1,128)}', space=vmem, size = 0x12000, scoped, tag = 'internal scratch']
  %s0 = inlined_call_operand.vmem [shape: f32[32,256], index: 0, kind: input, shape index: {}]
  %s1 = inlined_call_operand.vmem [shape: f32[8,256], index: 1, kind: input, shape index: {}]
  %s2 = inlined_call_operand.vmem [shape: f32[16,32], index: 2, kind: input, shape index: {}]
  %s3 = inlined_call_operand.vmem [shape: f32[16,1], index: 3, kind: input, shape index: {}]
  %s4 = inlined_call_operand.vmem [shape: f32[16,16], index: 4, kind: input, shape index: {}]
  %s5 = inlined_call_operand.vmem [shape: f32[16,1], index: 5, kind: input, shape index: {}]
  %s6 = inlined_call_operand.vmem [shape: f32[16,8], index: 6, kind: input, shape index: {}]
  %s7 = inlined_call_operand.vmem [shape: f32[16,1], index: 7, kind: input, shape index: {}]
  %s8 = inlined_call_operand.vmem [shape: f32[32,16], index: 8, kind: input, shape index: {}]
  %s9 = inlined_call_operand.vmem [shape: f32[32,1], index: 9, kind: input, shape index: {}]
  %s10 = inlined_call_operand.hbm [shape: f32[48,256], index: 10, kind: output, shape index: {}]
  %s11 = sld [smem:[#allocation0]]
  $region50: #{tpu_custom_call.1} parent=0
    _
  %s13 = ssub.s32 1, %s11
  %s14 = scalar_select 0, %s13, %s11
  $region1: #{tpu_custom_call.1} parent=0
    #allocation2 [shape = 'u8[49152]{0}', space=vmem, size = 0xc000, scoped, tag = 'output window, operand 0, single buffered']
    #allocation3 [shape = 's32[1]{0}', space=sflag, size = 0x4, scoped, tag = 'scoped memory for tpu_custom_call.1']
    %15 = vsyncpa [#allocation3], 0
    // Predicated region
    $region2: #{tpu_custom_call.1} parent=1 // pred_check
      _
    $region3: #{tpu_custom_call.1} parent=1 // pred_check_branch
      %17 = sbr.rel (0) target = $region5
    $region4: #{tpu_custom_call.1} parent=1 // pred_region
      _
    $region5: #{tpu_custom_call.1} parent=1 // pred_fallthru
      _
    // Predicated region
    $region6: #{tpu_custom_call.1} parent=1 // pred_check
      _
    $region7: #{tpu_custom_call.1} parent=1 // pred_check_branch
      %19 = sbr.rel (0) target = $region9
    $region8: #{tpu_custom_call.1} parent=1 // pred_region
      _
    $region9: #{tpu_custom_call.1} parent=1 // pred_fallthru
      _
    // Predicated region
    $region10: #{tpu_custom_call.1} parent=1 // pred_check
      _
    $region11: #{tpu_custom_call.1} parent=1 // pred_check_branch
      %21 = sbr.rel (0) target = $region13
    $region12: #{tpu_custom_call.1} parent=1 // pred_region
      _
    $region13: #{tpu_custom_call.1} parent=1 // pred_fallthru
      _
    // Predicated region
    $region14: #{tpu_custom_call.1} parent=1 // pred_check
      _
    $region15: #{tpu_custom_call.1} parent=1 // pred_check_branch
      %23 = sbr.rel (0) target = $region17
    $region16: #{tpu_custom_call.1} parent=1 // pred_region
      _
    $region17: #{tpu_custom_call.1} parent=1 // pred_fallthru
      _
    // Predicated region
    $region18: #{tpu_custom_call.1} parent=1 // pred_check
      _
    $region19: #{tpu_custom_call.1} parent=1 // pred_check_branch
      %25 = sbr.rel (0) target = $region21
    $region20: #{tpu_custom_call.1} parent=1 // pred_region
      _
    $region21: #{tpu_custom_call.1} parent=1 // pred_fallthru
      _
    // Predicated region
    $region22: #{tpu_custom_call.1} parent=1 // pred_check
      _
    $region23: #{tpu_custom_call.1} parent=1 // pred_check_branch
      %27 = sbr.rel (0) target = $region25
    $region24: #{tpu_custom_call.1} parent=1 // pred_region
      _
    $region25: #{tpu_custom_call.1} parent=1 // pred_fallthru
      _
    // Predicated region
    $region26: #{tpu_custom_call.1} parent=1 // pred_check
      _
    $region27: #{tpu_custom_call.1} parent=1 // pred_check_branch
      %29 = sbr.rel (0) target = $region29
    $region28: #{tpu_custom_call.1} parent=1 // pred_region
      _
    $region29: #{tpu_custom_call.1} parent=1 // pred_fallthru
      _
    // Predicated region
    $region30: #{tpu_custom_call.1} parent=1 // pred_check
      _
    $region31: #{tpu_custom_call.1} parent=1 // pred_check_branch
      %31 = sbr.rel (0) target = $region33
    $region32: #{tpu_custom_call.1} parent=1 // pred_region
      _
    $region33: #{tpu_custom_call.1} parent=1 // pred_fallthru
      _
    // Predicated region
    $region34: #{tpu_custom_call.1} parent=1 // pred_check
      _
    $region35: #{tpu_custom_call.1} parent=1 // pred_check_branch
      %33 = sbr.rel (0) target = $region37
    $region36: #{tpu_custom_call.1} parent=1 // pred_region
      _
    $region37: #{tpu_custom_call.1} parent=1 // pred_fallthru
      _
    // Predicated region
    $region38: #{tpu_custom_call.1} parent=1 // pred_check
      _
    $region39: #{tpu_custom_call.1} parent=1 // pred_check_branch
      %35 = sbr.rel (0) target = $region41
    $region40: #{tpu_custom_call.1} parent=1 // pred_region
      _
    $region41: #{tpu_custom_call.1} parent=1 // pred_fallthru
      _
    %v36 = vld [vmem:[%s0] sm:$0xff]
    %v37 = vld [vmem:[%s0 + $0x8] sm:$0xff]
    %v38 = vld [vmem:[%s0 + $0x10] sm:$0xff]
    %v39 = vld [vmem:[%s0 + $0x18] sm:$0xff]
    %v40 = vld [vmem:[%s0 + $0x20] sm:$0xff]
    %v41 = vld [vmem:[%s0 + $0x28] sm:$0xff]
    %v42 = vld [vmem:[%s0 + $0x30] sm:$0xff]
    %v43 = vld [vmem:[%s0 + $0x38] sm:$0xff]
    %v44 = vld [vmem:[%s2] sm:$0xff]
    %v45 = vld [vmem:[%s2 + $0x8] sm:$0xff]
    %v46 = vld [vmem:[%s3] sm:$0xff]
    %v47 = vld [vmem:[%s3 + $0x8] sm:$0xff]
    %49 = vset.pattern.permute.xlu0 0
    %50 = vperm.xlu0 %49, %v46
    %v51 = vpop.permute.xlu0 %50
    %54 = vset.pattern.permute.xlu0 0
    %55 = vperm.xlu0 %54, %v47
    %v56 = vpop.permute.xlu0 %55
    %vm58 = vcmask 261120
    %v60 = vsel %vm58, %v44, 0
    %v63 = vsel %vm58, %v45, 0
    %65 = vmatprep.subr.mxu0 0.0
    %66 = vmatpush1.msra.mxu0 0.0
    %67 = vmatprep.subr.mxu0 0.0
    %68 = vmatpush1.msra.mxu0 0.0
    %69 = vmatprep.subr.mxu0 0.0
    %70 = vmatpush1.msra.mxu0 0.0
    %71 = vmatprep.subr.mxu0 0.0
    %72 = vmatpush1.msra.mxu0 0.0
    %73 = vmatprep.subr.mxu0 0.0
    %74 = vmatpush1.msra.mxu0 0.0
    %75 = vmatprep.subr.mxu0 0.0
    %76 = vmatpush1.msra.mxu0 0.0
    %77 = vmatprep.subr.mxu0 0.0
    %78 = vmatpush1.msra.mxu0 0.0
    %79 = vmatprep.subr.mxu0 0.0
    %80 = vmatpush1.msra.mxu0 0.0
    %81 = vmatprep.subr.mxu0 0.0
    %82 = vmatpush1.msra.mxu0 0.0
    %83 = vmatprep.subr.mxu0 0.0
    %84 = vmatpush1.msra.mxu0 0.0
    %85 = vmatprep.subr.mxu0 0.0
    %86 = vmatpush1.msra.mxu0 0.0
    %87 = vmatprep.subr.mxu0 0.0
    %88 = vmatpush1.msra.mxu0 0.0
    %89 = vmatprep.subr.mxu0 %v43
    %90 = vmatpush1.msra.mxu0 %v42
    %91 = vmatprep.subr.mxu0 %v41
    %92 = vmatpush1.msra.mxu0 %v40
    %93 = vmatprep.subr.mxu0 %v39
    %94 = vmatpush1.msra.mxu0 %v38
    %95 = vmatprep.subr.mxu0 %v37
    %96 = vmatpush1.msra.mxu0 %v36
    %97 = vmatprep.subr.mxu0 0.0
    %98 = vmatpush2.msra.mxu0 0.0
    %99 = vmatprep.subr.mxu0 0.0
    %100 = vmatpush2.msra.mxu0 0.0
    %101 = vmatprep.subr.mxu0 0.0
    %102 = vmatpush2.msra.mxu0 0.0
    %103 = vmatprep.subr.mxu0 0.0
    %104 = vmatpush2.msra.mxu0 0.0
    %105 = vmatprep.subr.mxu0 0.0
    %106 = vmatpush2.msra.mxu0 0.0
    %107 = vmatprep.subr.mxu0 0.0
    %108 = vmatpush2.msra.mxu0 0.0
    %109 = vmatprep.subr.mxu0 0.0
    %110 = vmatpush2.msra.mxu0 0.0
    %111 = vmatprep.subr.mxu0 0.0
    %112 = vmatpush2.msra.mxu0 0.0
    %113 = vmatprep.subr.mxu0 0.0
    %114 = vmatpush2.msra.mxu0 0.0
    %115 = vmatprep.subr.mxu0 0.0
    %116 = vmatpush2.msra.mxu0 0.0
    %117 = vmatprep.subr.mxu0 0.0
    %118 = vmatpush2.msra.mxu0 0.0
    %119 = vmatprep.subr.mxu0 0.0
    %120 = vmatpush2.msra.mxu0 0.0
    %121 = vmatprep.subr.mxu0 0.0
    %122 = vmatpush2.msra.mxu0 0.0
    %123 = vmatprep.subr.mxu0 0.0
    %124 = vmatpush2.msra.mxu0 0.0
    %125 = vmatprep.subr.mxu0 0.0
    %126 = vmatpush2.msra.mxu0 0.0
    %127 = vmatprep.subr.mxu0 0.0
    %128 = vmatpush2.msra.mxu0 0.0
    %129 = vmatprep.mubr.f32.mxu0 0.0
    %130 = vmatmul.mubr.f32.gmra.mxu0 %v60
    %v131 = vpop.f32.mrf.mxu0
    %v132 = vadd.f32 %v51, %v131
    %v133 = vpop.f32.mrf.mxu0
    %v134 = vadd.f32 %v51, %v133
    %135 = vmatprep.mubr.f32.mxu0 0.0
    %136 = vmatmul.mubr.f32.gmra.mxu0 %v63
    %v137 = vpop.f32.mrf.mxu0
    %v138 = vadd.f32 %v56, %v137
    %v139 = vpop.f32.mrf.mxu0
    %v140 = vadd.f32 %v56, %v139
    %141 = vdwg.mxu0
    %v142 = vmax.f32 %v132, 0.0
    %v143 = vmax.f32 %v134, 0.0
    %v144 = vmax.f32 %v138, 0.0
    %v145 = vmax.f32 %v140, 0.0
    %v146 = vld [vmem:[%s4] sm:$0xff]
    %v147 = vld [vmem:[%s4 + $0x8] sm:$0xff]
    %v148 = vld [vmem:[%s5] sm:$0xff]
    %v149 = vld [vmem:[%s5 + $0x8] sm:$0xff]
    %151 = vset.pattern.permute.xlu0 0
    %152 = vperm.xlu0 %151, %v148
    %v153 = vpop.permute.xlu0 %152
    %156 = vset.pattern.permute.xlu0 0
    %157 = vperm.xlu0 %156, %v149
    %v158 = vpop.permute.xlu0 %157
    %vm160 = vcmask 130048
    %v162 = vsel %vm160, %v146, 0
    %v165 = vsel %vm160, %v147, 0
    %167 = vmatprep.subr.mxu0 0.0
    %168 = vmatpush1.msra.mxu0 0.0
    %169 = vmatprep.subr.mxu0 0.0
    %170 = vmatpush1.msra.mxu0 0.0
    %171 = vmatprep.subr.mxu0 0.0
    %172 = vmatpush1.msra.mxu0 0.0
    %173 = vmatprep.subr.mxu0 0.0
    %174 = vmatpush1.msra.mxu0 0.0
    %175 = vmatprep.subr.mxu0 0.0
    %176 = vmatpush1.msra.mxu0 0.0
    %177 = vmatprep.subr.mxu0 0.0
    %178 = vmatpush1.msra.mxu0 0.0
    %179 = vmatprep.subr.mxu0 0.0
    %180 = vmatpush1.msra.mxu0 0.0
    %181 = vmatprep.subr.mxu0 0.0
    %182 = vmatpush1.msra.mxu0 0.0
    %183 = vmatprep.subr.mxu0 0.0
    %184 = vmatpush1.msra.mxu0 0.0
    %185 = vmatprep.subr.mxu0 0.0
    %186 = vmatpush1.msra.mxu0 0.0
    %187 = vmatprep.subr.mxu0 0.0
    %188 = vmatpush1.msra.mxu0 0.0
    %189 = vmatprep.subr.mxu0 0.0
    %190 = vmatpush1.msra.mxu0 0.0
    %191 = vmatprep.subr.mxu0 0.0
    %192 = vmatpush1.msra.mxu0 0.0
    %193 = vmatprep.subr.mxu0 0.0
    %194 = vmatpush1.msra.mxu0 0.0
    %195 = vmatprep.subr.mxu0 %v145
    %196 = vmatpush1.msra.mxu0 %v144
    %197 = vmatprep.subr.mxu0 %v143
    %198 = vmatpush1.msra.mxu0 %v142
    %199 = vmatprep.subr.mxu0 0.0
    %200 = vmatpush2.msra.mxu0 0.0
    %201 = vmatprep.subr.mxu0 0.0
    %202 = vmatpush2.msra.mxu0 0.0
    %203 = vmatprep.subr.mxu0 0.0
    %204 = vmatpush2.msra.mxu0 0.0
    %205 = vmatprep.subr.mxu0 0.0
    %206 = vmatpush2.msra.mxu0 0.0
    %207 = vmatprep.subr.mxu0 0.0
    %208 = vmatpush2.msra.mxu0 0.0
    %209 = vmatprep.subr.mxu0 0.0
    %210 = vmatpush2.msra.mxu0 0.0
    %211 = vmatprep.subr.mxu0 0.0
    %212 = vmatpush2.msra.mxu0 0.0
    %213 = vmatprep.subr.mxu0 0.0
    %214 = vmatpush2.msra.mxu0 0.0
    %215 = vmatprep.subr.mxu0 0.0
    %216 = vmatpush2.msra.mxu0 0.0
    %217 = vmatprep.subr.mxu0 0.0
    %218 = vmatpush2.msra.mxu0 0.0
    %219 = vmatprep.subr.mxu0 0.0
    %220 = vmatpush2.msra.mxu0 0.0
    %221 = vmatprep.subr.mxu0 0.0
    %222 = vmatpush2.msra.mxu0 0.0
    %223 = vmatprep.subr.mxu0 0.0
    %224 = vmatpush2.msra.mxu0 0.0
    %225 = vmatprep.subr.mxu0 0.0
    %226 = vmatpush2.msra.mxu0 0.0
    %227 = vmatprep.subr.mxu0 0.0
    %228 = vmatpush2.msra.mxu0 0.0
    %229 = vmatprep.subr.mxu0 0.0
    %230 = vmatpush2.msra.mxu0 0.0
    %231 = vmatprep.mubr.f32.mxu0 0.0
    %232 = vmatmul.mubr.f32.gmra.mxu0 %v162
    %v233 = vpop.f32.mrf.mxu0
    %v234 = vadd.f32 %v153, %v233
    %v235 = vpop.f32.mrf.mxu0
    %v236 = vadd.f32 %v153, %v235
    %237 = vmatprep.mubr.f32.mxu0 0.0
    %238 = vmatmul.mubr.f32.gmra.mxu0 %v165
    %v239 = vpop.f32.mrf.mxu0
    %v240 = vadd.f32 %v158, %v239
    %v241 = vpop.f32.mrf.mxu0
    %v242 = vadd.f32 %v158, %v241
    %243 = vdwg.mxu0
    %v244 = vld [vmem:[%s1] sm:$0xff]
    %v245 = vld [vmem:[%s1 + $0x8] sm:$0xff]
    %v246 = vmul.f32 %v240, 0.5
    %v247 = vmul.f32 %v242, 0.5
    %v248 = vmul.f32 %v246, 1.442695
    %v249 = vpow.pop %v248
    %v250 = vmul.f32 %v247, 1.442695
    %v251 = vpow.pop %v250
    %v252 = vmul.f32 %v244, %v249
    %v253 = vmul.f32 %v245, %v251
    %v254 = vadd.f32 %v234, %v252
    %v255 = vadd.f32 %v236, %v253
    %v256 = vld [vmem:[%s6] sm:$0xff]
    %v257 = vld [vmem:[%s6 + $0x8] sm:$0xff]
    %v258 = vld [vmem:[%s7] sm:$0xff]
    %v259 = vld [vmem:[%s7 + $0x8] sm:$0xff]
    %261 = vset.pattern.permute.xlu0 0
    %262 = vperm.xlu0 %261, %v258
    %v263 = vpop.permute.xlu0 %262
    %266 = vset.pattern.permute.xlu0 0
    %267 = vperm.xlu0 %266, %v259
    %v268 = vpop.permute.xlu0 %267
    %vm270 = vcmask 64512
    %v272 = vsel %vm270, %v256, 0
    %v275 = vsel %vm270, %v257, 0
    %277 = vmatprep.subr.mxu0 0.0
    %278 = vmatpush1.msra.mxu0 0.0
    %279 = vmatprep.subr.mxu0 0.0
    %280 = vmatpush1.msra.mxu0 0.0
    %281 = vmatprep.subr.mxu0 0.0
    %282 = vmatpush1.msra.mxu0 0.0
    %283 = vmatprep.subr.mxu0 0.0
    %284 = vmatpush1.msra.mxu0 0.0
    %285 = vmatprep.subr.mxu0 0.0
    %286 = vmatpush1.msra.mxu0 0.0
    %287 = vmatprep.subr.mxu0 0.0
    %288 = vmatpush1.msra.mxu0 0.0
    %289 = vmatprep.subr.mxu0 0.0
    %290 = vmatpush1.msra.mxu0 0.0
    %291 = vmatprep.subr.mxu0 0.0
    %292 = vmatpush1.msra.mxu0 0.0
    %293 = vmatprep.subr.mxu0 0.0
    %294 = vmatpush1.msra.mxu0 0.0
    %295 = vmatprep.subr.mxu0 0.0
    %296 = vmatpush1.msra.mxu0 0.0
    %297 = vmatprep.subr.mxu0 0.0
    %298 = vmatpush1.msra.mxu0 0.0
    %299 = vmatprep.subr.mxu0 0.0
    %300 = vmatpush1.msra.mxu0 0.0
    %301 = vmatprep.subr.mxu0 0.0
    %302 = vmatpush1.msra.mxu0 0.0
    %303 = vmatprep.subr.mxu0 0.0
    %304 = vmatpush1.msra.mxu0 0.0
    %305 = vmatprep.subr.mxu0 0.0
    %306 = vmatpush1.msra.mxu0 0.0
    %307 = vmatprep.subr.mxu0 %v255
    %308 = vmatpush1.msra.mxu0 %v254
    %309 = vmatprep.subr.mxu0 0.0
    %310 = vmatpush2.msra.mxu0 0.0
    %311 = vmatprep.subr.mxu0 0.0
    %312 = vmatpush2.msra.mxu0 0.0
    %313 = vmatprep.subr.mxu0 0.0
    %314 = vmatpush2.msra.mxu0 0.0
    %315 = vmatprep.subr.mxu0 0.0
    %316 = vmatpush2.msra.mxu0 0.0
    %317 = vmatprep.subr.mxu0 0.0
    %318 = vmatpush2.msra.mxu0 0.0
    %319 = vmatprep.subr.mxu0 0.0
    %320 = vmatpush2.msra.mxu0 0.0
    %321 = vmatprep.subr.mxu0 0.0
    %322 = vmatpush2.msra.mxu0 0.0
    %323 = vmatprep.subr.mxu0 0.0
    %324 = vmatpush2.msra.mxu0 0.0
    %325 = vmatprep.subr.mxu0 0.0
    %326 = vmatpush2.msra.mxu0 0.0
    %327 = vmatprep.subr.mxu0 0.0
    %328 = vmatpush2.msra.mxu0 0.0
    %329 = vmatprep.subr.mxu0 0.0
    %330 = vmatpush2.msra.mxu0 0.0
    %331 = vmatprep.subr.mxu0 0.0
    %332 = vmatpush2.msra.mxu0 0.0
    %333 = vmatprep.subr.mxu0 0.0
    %334 = vmatpush2.msra.mxu0 0.0
    %335 = vmatprep.subr.mxu0 0.0
    %336 = vmatpush2.msra.mxu0 0.0
    %337 = vmatprep.subr.mxu0 0.0
    %338 = vmatpush2.msra.mxu0 0.0
    %339 = vmatprep.subr.mxu0 0.0
    %340 = vmatpush2.msra.mxu0 0.0
    %341 = vmatprep.mubr.f32.mxu0 0.0
    %342 = vmatmul.mubr.f32.gmra.mxu0 %v272
    %v343 = vpop.f32.mrf.mxu0
    %v344 = vadd.f32 %v263, %v343
    %v345 = vpop.f32.mrf.mxu0
    %v346 = vadd.f32 %v263, %v345
    %347 = vmatprep.mubr.f32.mxu0 0.0
    %348 = vmatmul.mubr.f32.gmra.mxu0 %v275
    %v349 = vpop.f32.mrf.mxu0
    %v350 = vadd.f32 %v268, %v349
    %v351 = vpop.f32.mrf.mxu0
    %v352 = vadd.f32 %v268, %v351
    %353 = vdwg.mxu0
    %v354 = vmax.f32 %v344, 0.0
    %v355 = vmax.f32 %v346, 0.0
    %v356 = vmax.f32 %v350, 0.0
    %v357 = vmax.f32 %v352, 0.0
    %v358 = vld [vmem:[%s8] sm:$0xff]
    %v359 = vld [vmem:[%s8 + $0x8] sm:$0xff]
    %v360 = vld [vmem:[%s8 + $0x10] sm:$0xff]
    %v361 = vld [vmem:[%s8 + $0x18] sm:$0xff]
    %v362 = vld [vmem:[%s9] sm:$0xff]
    %v363 = vld [vmem:[%s9 + $0x8] sm:$0xff]
    %v364 = vld [vmem:[%s9 + $0x10] sm:$0xff]
    %v365 = vld [vmem:[%s9 + $0x18] sm:$0xff]
    %367 = vset.pattern.permute.xlu0 0
    %368 = vperm.xlu0 %367, %v362
    %v369 = vpop.permute.xlu0 %368
    %372 = vset.pattern.permute.xlu0 0
    %373 = vperm.xlu0 %372, %v363
    %v374 = vpop.permute.xlu0 %373
    %377 = vset.pattern.permute.xlu0 0
    %378 = vperm.xlu0 %377, %v364
    %v379 = vpop.permute.xlu0 %378
    %382 = vset.pattern.permute.xlu0 0
    %383 = vperm.xlu0 %382, %v365
    %v384 = vpop.permute.xlu0 %383
    %v387 = vsel %vm160, %v358, 0
    %v390 = vsel %vm160, %v359, 0
    %v393 = vsel %vm160, %v360, 0
    %v396 = vsel %vm160, %v361, 0
    %398 = vmatprep.subr.mxu0 0.0
    %399 = vmatpush1.msra.mxu0 0.0
    %400 = vmatprep.subr.mxu0 0.0
    %401 = vmatpush1.msra.mxu0 0.0
    %402 = vmatprep.subr.mxu0 0.0
    %403 = vmatpush1.msra.mxu0 0.0
    %404 = vmatprep.subr.mxu0 0.0
    %405 = vmatpush1.msra.mxu0 0.0
    %406 = vmatprep.subr.mxu0 0.0
    %407 = vmatpush1.msra.mxu0 0.0
    %408 = vmatprep.subr.mxu0 0.0
    %409 = vmatpush1.msra.mxu0 0.0
    %410 = vmatprep.subr.mxu0 0.0
    %411 = vmatpush1.msra.mxu0 0.0
    %412 = vmatprep.subr.mxu0 0.0
    %413 = vmatpush1.msra.mxu0 0.0
    %414 = vmatprep.subr.mxu0 0.0
    %415 = vmatpush1.msra.mxu0 0.0
    %416 = vmatprep.subr.mxu0 0.0
    %417 = vmatpush1.msra.mxu0 0.0
    %418 = vmatprep.subr.mxu0 0.0
    %419 = vmatpush1.msra.mxu0 0.0
    %420 = vmatprep.subr.mxu0 0.0
    %421 = vmatpush1.msra.mxu0 0.0
    %422 = vmatprep.subr.mxu0 0.0
    %423 = vmatpush1.msra.mxu0 0.0
    %424 = vmatprep.subr.mxu0 0.0
    %425 = vmatpush1.msra.mxu0 0.0
    %426 = vmatprep.subr.mxu0 %v357
    %427 = vmatpush1.msra.mxu0 %v356
    %428 = vmatprep.subr.mxu0 %v355
    %429 = vmatpush1.msra.mxu0 %v354
    %430 = vmatprep.subr.mxu0 0.0
    %431 = vmatpush2.msra.mxu0 0.0
    %432 = vmatprep.subr.mxu0 0.0
    %433 = vmatpush2.msra.mxu0 0.0
    %434 = vmatprep.subr.mxu0 0.0
    %435 = vmatpush2.msra.mxu0 0.0
    %436 = vmatprep.subr.mxu0 0.0
    %437 = vmatpush2.msra.mxu0 0.0
    %438 = vmatprep.subr.mxu0 0.0
    %439 = vmatpush2.msra.mxu0 0.0
    %440 = vmatprep.subr.mxu0 0.0
    %441 = vmatpush2.msra.mxu0 0.0
    %442 = vmatprep.subr.mxu0 0.0
    %443 = vmatpush2.msra.mxu0 0.0
    %444 = vmatprep.subr.mxu0 0.0
    %445 = vmatpush2.msra.mxu0 0.0
    %446 = vmatprep.subr.mxu0 0.0
    %447 = vmatpush2.msra.mxu0 0.0
    %448 = vmatprep.subr.mxu0 0.0
    %449 = vmatpush2.msra.mxu0 0.0
    %450 = vmatprep.subr.mxu0 0.0
    %451 = vmatpush2.msra.mxu0 0.0
    %452 = vmatprep.subr.mxu0 0.0
    %453 = vmatpush2.msra.mxu0 0.0
    %454 = vmatprep.subr.mxu0 0.0
    %455 = vmatpush2.msra.mxu0 0.0
    %456 = vmatprep.subr.mxu0 0.0
    %457 = vmatpush2.msra.mxu0 0.0
    %458 = vmatprep.subr.mxu0 0.0
    %459 = vmatpush2.msra.mxu0 0.0
    %460 = vmatprep.subr.mxu0 0.0
    %461 = vmatpush2.msra.mxu0 0.0
    %462 = vmatprep.mubr.f32.mxu0 0.0
    %463 = vmatmul.mubr.f32.gmra.mxu0 %v387
    %v464 = vpop.f32.mrf.mxu0
    %v465 = vadd.f32 %v369, %v464
    %v466 = vpop.f32.mrf.mxu0
    %v467 = vadd.f32 %v369, %v466
    %468 = vmatprep.mubr.f32.mxu0 0.0
    %469 = vmatmul.mubr.f32.gmra.mxu0 %v390
    %v470 = vpop.f32.mrf.mxu0
    %v471 = vadd.f32 %v374, %v470
    %v472 = vpop.f32.mrf.mxu0
    %v473 = vadd.f32 %v374, %v472
    %474 = vmatprep.mubr.f32.mxu0 0.0
    %475 = vmatmul.mubr.f32.gmra.mxu0 %v393
    %v476 = vpop.f32.mrf.mxu0
    %v477 = vadd.f32 %v379, %v476
    %v478 = vpop.f32.mrf.mxu0
    %v479 = vadd.f32 %v379, %v478
    %480 = vmatprep.mubr.f32.mxu0 0.0
    %481 = vmatmul.mubr.f32.gmra.mxu0 %v396
    %v482 = vpop.f32.mrf.mxu0
    %v483 = vadd.f32 %v384, %v482
    %v484 = vpop.f32.mrf.mxu0
    %v485 = vadd.f32 %v384, %v484
    %486 = vdwg.mxu0
    %v487 = vtanh.pop %v465
    %v488 = vtanh.pop %v467
    %v489 = vtanh.pop %v471
    %v490 = vtanh.pop %v473
    %v491 = vtanh.pop %v477
    %v492 = vtanh.pop %v479
    %v493 = vtanh.pop %v483
    %v494 = vtanh.pop %v485
    %495 = vst [vmem:[#allocation2] sm:$0xff] %v487
    %496 = vst [vmem:[#allocation2 + $0x8] sm:$0xff] %v488
    %497 = vst [vmem:[#allocation2 + $0x10] sm:$0xff] %v489
    %498 = vst [vmem:[#allocation2 + $0x18] sm:$0xff] %v490
    %499 = vst [vmem:[#allocation2 + $0x20] sm:$0xff] %v491
    %500 = vst [vmem:[#allocation2 + $0x28] sm:$0xff] %v492
    %501 = vst [vmem:[#allocation2 + $0x30] sm:$0xff] %v493
    %502 = vst [vmem:[#allocation2 + $0x38] sm:$0xff] %v494
    %503 = vst [vmem:[#allocation2 + $0x40] sm:$0xff] %v234
    %504 = vst [vmem:[#allocation2 + $0x48] sm:$0xff] %v236
    %505 = vst [vmem:[#allocation2 + $0x50] sm:$0xff] %v240
    %506 = vst [vmem:[#allocation2 + $0x58] sm:$0xff] %v242
    // Predicated region
    $region42: #{tpu_custom_call.1} parent=1 // pred_check
      _
    $region43: #{tpu_custom_call.1} parent=1 // pred_check_branch
      %508 = sbr.rel (0) target = $region45
    $region44: #{tpu_custom_call.1} parent=1 // pred_region
      %s510 = ssub.s32 1536, 1536
      %511 = vsyncadd [#allocation3], %s510
      %s512 = sshll.u32 [#allocation2], 4
      %s513 = int_to_ptr.vmem [resolvable:$true] %s512
      %518 = dma.vmem_to_hbm [thread:$0]  %s513, 1536, %s10, [#allocation3], 256, 256, 16
    $region45: #{tpu_custom_call.1} parent=1 // pred_fallthru
      _
    // Predicated region
    $region46: #{tpu_custom_call.1} parent=1 // pred_check
      _
    $region47: #{tpu_custom_call.1} parent=1 // pred_check_branch
      %520 = sbr.rel (0) target = $region49
    $region48: #{tpu_custom_call.1} parent=1 // pred_region
      %521 = dma.done [#allocation3], 1536
    $region49: #{tpu_custom_call.1} parent=1 // pred_fallthru
      _
    %522 = vsyncpa [#allocation3], 1

</llo_original>
